<compile_context>
chip_gen: v7x
topology: tpu7x:2x2x1
jax: 0.10.0
libtpu: 0.0.40
codegen_flags: <defaults>
</compile_context>

<pallas_src>
import jax
import jax.numpy as jnp
from jax.experimental import pallas as pl
from jax.experimental.pallas import tpu as pltpu


def attention_kernel(x_ref, w1_ref, b1_ref, w2_ref, out_ref):
    # Blocks: x (Bt, S, D), w1 (D, A), b1 (1, A), w2 (1, A), out (Bt, 1, S).
    Bt, S, D = x_ref.shape
    A = w1_ref.shape[1]

    # --- hidden projection: one MXU matmul over all Bt*S rows ----------------
    # Merging the leading (Bt, S) dims is layout-trivial when S is a multiple
    # of the sublane tile (8 for f32, 16 for bf16); otherwise it costs a VMEM
    # copy (perf hazard only, never a correctness issue).
    x2 = x_ref[...].reshape(Bt * S, D)
    h2 = jnp.tanh(
        jnp.dot(x2, w1_ref[...], preferred_element_type=jnp.float32)
        + b1_ref[...].astype(jnp.float32)        # (1, A) broadcasts over rows
    )                                            # (Bt*S, A), f32
    h = h2.reshape(Bt, S, A)

    # --- context vector: N=1 matmul as VPU multiply + cross-lane reduce ------
    w2v = w2_ref[...].astype(jnp.float32)        # (1, A)
    scores = jnp.sum(h * w2v, axis=-1)           # (Bt, S) -- S on lanes

    # --- softmax over the sequence axis (last / lane axis) -------------------
    m = jnp.max(scores, axis=-1, keepdims=True)  # (Bt, 1)
    e = jnp.exp(scores - m)                      # (Bt, S), f32 (EUP exp)
    denom = jnp.sum(e, axis=-1, keepdims=True)   # (Bt, 1)
    probs = e * pl.reciprocal(denom, approx=True)  # EUP vrcp, not VALU divide

    # Lane-dense store: out block is (Bt, 1, S); the size-1 middle dim keeps
    # the last (lane) axis intact -> unmasked vst.
    out_ref[...] = probs[:, None, :].astype(out_ref.dtype)


def _tensorcores_per_device():
    """Best-effort count of TensorCores behind one JAX device (v7x == 2)."""
    try:
        kind = str(jax.devices()[0].device_kind).lower()
    except Exception:
        return 1
    if "v7" in kind:
        return 2
    # v4 / v5p megacore devices also expose two TCs behind one device.
    if ("v4" in kind) or ("v5p" in kind) or ("v5 p" in kind):
        return 2
    return 1


def _pick_block_b(B, S, D, A, x_itemsize, out_itemsize, n_cores):
    """Byte-targeted batch-block size: this kernel is HBM-bound on x."""
    bytes_per_batch_x = S * D * x_itemsize
    # Target ~2 MiB of x per grid step (tiles well below ~1 MiB sit far under
    # the HBM roofline; per-step overhead ~0.35 us is otherwise exposed).
    target_tile_bytes = 2 * 1024 * 1024
    block_b = max(1, target_tile_bytes // bytes_per_batch_x)

    # VMEM cap: double-buffered x tile + f32 hidden intermediate + output,
    # kept comfortably under the scoped limits on every generation.
    per_batch_vmem = (2 * bytes_per_batch_x            # x double-buffer
                      + S * A * 4                      # h intermediate (f32)
                      + S * 4                          # scores/exp (f32)
                      + 2 * S * out_itemsize)          # out double-buffer
    vmem_budget = 12 * 1024 * 1024
    block_b = min(block_b, max(1, vmem_budget // per_batch_vmem))
    block_b = int(max(1, min(B, block_b)))

    if n_cores >= 2 and B >= 2:
        # Multi-TC chip: keep >=2 grid steps so both cores get work...
        block_b = min(block_b, pl.cdiv(B, 2))
        # ...and prefer an even step count so neither core idles on the tail.
        g = pl.cdiv(B, block_b)
        if g > 1 and g % 2 == 1:
            block_b = max(1, pl.cdiv(B, g + 1))
    return block_b


def attention_pallas(x, w1, b1, w2, *, block_b=None):
    """softmax_over_seq( tanh(x @ W1 + b1) @ w2^T ) for x of shape (B, S, D)."""
    B, S, D = x.shape
    Dw, A = w1.shape
    assert Dw == D and b1.shape == (1, A) and w2.shape == (1, A)
    out_dtype = x.dtype

    # Keep x exactly as given (a wrapper-side cast would add an extra HBM
    # round trip on a memory-bound kernel); only align the small matmul weight.
    if w1.dtype != x.dtype:
        w1 = w1.astype(x.dtype)

    n_cores = _tensorcores_per_device()
    if block_b is None:
        block_b = _pick_block_b(B, S, D, A, x.dtype.itemsize,
                                jnp.dtype(out_dtype).itemsize, n_cores)
    grid_b = pl.cdiv(B, block_b)
    # TODO(synk): add an S-tiled (online-softmax, flash-style) path when a
    # single (1, S, D) slab no longer fits the VMEM budget (very long S).

    cost = pl.CostEstimate(
        flops=2 * B * S * D * A + 2 * B * S * A,
        transcendentals=B * S * (A + 1),
        bytes_accessed=int(x.size * x.dtype.itemsize
                           + w1.size * w1.dtype.itemsize
                           + b1.size * b1.dtype.itemsize
                           + w2.size * w2.dtype.itemsize
                           + B * S * jnp.dtype(out_dtype).itemsize),
    )
    compiler_params = pltpu.CompilerParams(
        dimension_semantics=("parallel",),
        # 1-TC chips (v5e/v6e) have 128 MiB physical VMEM: raise the scoped
        # limit so large tiles fit. v7x (2 TC, 64 MiB total) keeps 32 MiB.
        vmem_limit_bytes=(48 if n_cores == 1 else 32) * 1024 * 1024,
    )

    def build(single_buffer_weights):
        # Weights have a constant index_map (resident across the whole grid),
        # so the default second pipeline buffer is pure VMEM waste.
        wkw = {"pipeline_mode": pl.Buffered(1)} if single_buffer_weights else {}
        return pl.pallas_call(
            attention_kernel,
            out_shape=jax.ShapeDtypeStruct((B, 1, S), out_dtype),
            grid_spec=pltpu.PrefetchScalarGridSpec(
                num_scalar_prefetch=0,
                grid=(grid_b,),
                in_specs=[
                    pl.BlockSpec((block_b, S, D), lambda b: (b, 0, 0)),  # x
                    pl.BlockSpec((D, A), lambda b: (0, 0), **wkw),       # W1
                    pl.BlockSpec((1, A), lambda b: (0, 0), **wkw),       # b1
                    pl.BlockSpec((1, A), lambda b: (0, 0), **wkw),       # w2
                ],
                out_specs=pl.BlockSpec((block_b, 1, S), lambda b: (b, 0, 0)),
            ),
            compiler_params=compiler_params,
            cost_estimate=cost,
        )

    try:
        out = build(True)(x, w1, b1, w2)
    except Exception:
        # Fallback if this Pallas version rejects Buffered(1): default
        # double-buffered weights are correct, just slightly more VMEM.
        out = build(False)(x, w1, b1, w2)

    # (B, 1, S) -> (B, S, 1): identical element order, free layout plumbing
    # outside the kernel, matching the PyTorch module's output shape.
    return out.reshape(B, S, 1)


def attention_reference(x, w1, b1, w2):
    scores = jnp.tanh(x @ w1 + b1) @ w2.T          # (B, S, 1)
    return jax.nn.softmax(scores, axis=1)


if __name__ == "__main__":
    B, S, D, A = 2, 8, 32, 16   # batch, seq, input_dim, attention_dim

    key = jax.random.PRNGKey(0)
    kx, kw1, kb1, kw2 = jax.random.split(key, 4)

    x = jax.random.normal(kx, (B, S, D), dtype=jnp.float32)
    # "Linear(input_dim, attention_dim)" params, W1 pre-transposed to (D, A).
    w1 = jax.random.normal(kw1, (D, A), dtype=jnp.float32) * 0.1
    b1 = jax.random.normal(kb1, (1, A), dtype=jnp.float32) * 0.1
    # "Linear(attention_dim, 1, bias=False)" weight in its natural (1, A) layout.
    w2 = jax.random.normal(kw2, (1, A), dtype=jnp.float32) * 0.1

    out = jax.block_until_ready(attention_pallas(x, w1, b1, w2))
    ref = attention_reference(x, w1, b1, w2)

    assert out.shape == (B, S, 1)
    # Tolerance covers pl.reciprocal(approx=True) in the softmax finalize.
    assert jnp.allclose(out, ref, atol=1e-3, rtol=1e-3), "mismatch vs reference"
    assert jnp.allclose(jnp.sum(out, axis=1), 1.0, atol=1e-3), "softmax not normalized"

    print("KERNEL_OK")
</pallas_src>

<mosaic_0001>
module attributes {stable_mosaic.version = 11 : i64} {
  func.func @attention_kernel(%arg0: i32, %arg1: memref<2x8x32xf32, #tpu.memory_space<vmem>>, %arg2: memref<32x16xf32, #tpu.memory_space<vmem>>, %arg3: memref<1x16xf32, #tpu.memory_space<vmem>>, %arg4: memref<1x16xf32, #tpu.memory_space<vmem>>, %arg5: memref<2x1x8xf32, #tpu.memory_space<vmem>>) attributes {dimension_semantics = [#tpu.dimension_semantics<parallel>], iteration_bounds = array<i64: 1>, scalar_prefetch = 0 : i64, scratch_operands = 0 : i64, tpu.core_type = #tpu.core_type<tc>, window_params = [{transform_indices = @transform_0, window_bounds = array<i64: 2, 8, 32>}, {pipeline_mode = #tpu.pipeline_mode<synchronous>, transform_indices = @transform_1, window_bounds = array<i64: 32, 16>}, {pipeline_mode = #tpu.pipeline_mode<synchronous>, transform_indices = @transform_2, window_bounds = array<i64: 1, 16>}, {pipeline_mode = #tpu.pipeline_mode<synchronous>, transform_indices = @transform_3, window_bounds = array<i64: 1, 16>}, {transform_indices = @transform_4, window_bounds = array<i64: 2, 1, 8>}]} {
    %c0 = arith.constant 0 : index
    %c0_0 = arith.constant 0 : index
    %c0_1 = arith.constant 0 : index
    %0 = vector.load %arg1[%c0, %c0_0, %c0_1] : memref<2x8x32xf32, #tpu.memory_space<vmem>>, vector<2x8x32xf32>
    %1 = vector.shape_cast %0 : vector<2x8x32xf32> to vector<16x32xf32>
    %c0_2 = arith.constant 0 : index
    %c0_3 = arith.constant 0 : index
    %2 = vector.load %arg2[%c0_2, %c0_3] : memref<32x16xf32, #tpu.memory_space<vmem>>, vector<32x16xf32>
    %cst = arith.constant dense<0.000000e+00> : vector<16x16xf32>
    %3 = tpu.matmul %1, %2, %cst {dimension_numbers = #tpu.dot_dimension_numbers<[1], [0], [0], [1], [0, 0, 1, 1], [], []>} : vector<16x32xf32>, vector<32x16xf32>, vector<16x16xf32> -> vector<16x16xf32>
    %c0_4 = arith.constant 0 : index
    %c0_5 = arith.constant 0 : index
    %4 = vector.load %arg3[%c0_4, %c0_5] : memref<1x16xf32, #tpu.memory_space<vmem>>, vector<1x16xf32>
    %5 = vector.broadcast %4 : vector<1x16xf32> to vector<16x16xf32>
    %6 = arith.addf %3, %5 : vector<16x16xf32>
    %7 = math.tanh %6 : vector<16x16xf32>
    %8 = vector.shape_cast %7 : vector<16x16xf32> to vector<2x8x16xf32>
    %c0_6 = arith.constant 0 : index
    %c0_7 = arith.constant 0 : index
    %9 = vector.load %arg4[%c0_6, %c0_7] : memref<1x16xf32, #tpu.memory_space<vmem>>, vector<1x16xf32>
    %10 = vector.shape_cast %9 : vector<1x16xf32> to vector<1x1x16xf32>
    %11 = vector.broadcast %10 : vector<1x1x16xf32> to vector<2x8x16xf32>
    %12 = arith.mulf %8, %11 : vector<2x8x16xf32>
    %cst_8 = arith.constant dense<0.000000e+00> : vector<2x8xf32>
    %13 = vector.multi_reduction <add>, %12, %cst_8 [2] : vector<2x8x16xf32> to vector<2x8xf32>
    %cst_9 = arith.constant dense<0xFF800000> : vector<2xf32>
    %14 = vector.multi_reduction <maximumf>, %13, %cst_9 [1] : vector<2x8xf32> to vector<2xf32>
    %15 = vector.shape_cast %14 : vector<2xf32> to vector<2x1xf32>
    %16 = vector.broadcast %15 : vector<2x1xf32> to vector<2x8xf32>
    %17 = arith.subf %13, %16 : vector<2x8xf32>
    %18 = math.exp %17 : vector<2x8xf32>
    %cst_10 = arith.constant dense<0.000000e+00> : vector<2xf32>
    %19 = vector.multi_reduction <add>, %18, %cst_10 [1] : vector<2x8xf32> to vector<2xf32>
    %20 = vector.shape_cast %19 : vector<2xf32> to vector<2x1xf32>
    %21 = tpu.reciprocal %20 {approx = true} : vector<2x1xf32> -> vector<2x1xf32>
    %22 = vector.broadcast %21 : vector<2x1xf32> to vector<2x8xf32>
    %23 = arith.mulf %18, %22 : vector<2x8xf32>
    %24 = vector.shape_cast %23 : vector<2x8xf32> to vector<2x1x8xf32>
    %c0_11 = arith.constant 0 : index
    %c0_12 = arith.constant 0 : index
    %c0_13 = arith.constant 0 : index
    %25 = vector.load %arg5[%c0_11, %c0_12, %c0_13] : memref<2x1x8xf32, #tpu.memory_space<vmem>>, vector<2x1x8xf32>
    tpu.vector_store %arg5[%c0_11, %c0_12, %c0_13], %24 {strides = array<i32>} : memref<2x1x8xf32, #tpu.memory_space<vmem>>, vector<2x1x8xf32>,
    return
  }
  func.func @transform_0(%arg0: i32) -> (i32, i32, i32) {
    %c0_i32 = arith.constant 0 : i32
    %c0_i32_0 = arith.constant 0 : i32
    %c0_i32_1 = arith.constant 0 : i32
    return %arg0, %c0_i32, %c0_i32_0 : i32, i32, i32
  }
  func.func @transform_1(%arg0: i32) -> (i32, i32) {
    %c0_i32 = arith.constant 0 : i32
    %c0_i32_0 = arith.constant 0 : i32
    %c0_i32_1 = arith.constant 0 : i32
    return %c0_i32, %c0_i32_0 : i32, i32
  }
  func.func @transform_2(%arg0: i32) -> (i32, i32) {
    %c0_i32 = arith.constant 0 : i32
    %c0_i32_0 = arith.constant 0 : i32
    %c0_i32_1 = arith.constant 0 : i32
    return %c0_i32, %c0_i32_0 : i32, i32
  }
  func.func @transform_3(%arg0: i32) -> (i32, i32) {
    %c0_i32 = arith.constant 0 : i32
    %c0_i32_0 = arith.constant 0 : i32
    %c0_i32_1 = arith.constant 0 : i32
    return %c0_i32, %c0_i32_0 : i32, i32
  }
  func.func @transform_4(%arg0: i32) -> (i32, i32, i32) {
    %c0_i32 = arith.constant 0 : i32
    %c0_i32_0 = arith.constant 0 : i32
    %c0_i32_1 = arith.constant 0 : i32
    return %arg0, %c0_i32, %c0_i32_0 : i32, i32, i32
  }
}

module attributes {stable_mosaic.version = 11 : i64} {
  func.func @attention_kernel(%arg0: i32, %arg1: memref<2x8x32xf32, #tpu.memory_space<vmem>>, %arg2: memref<32x16xf32, #tpu.memory_space<vmem>>, %arg3: memref<1x16xf32, #tpu.memory_space<vmem>>, %arg4: memref<1x16xf32, #tpu.memory_space<vmem>>, %arg5: memref<2x1x8xf32, #tpu.memory_space<vmem>>) attributes {dimension_semantics = [#tpu.dimension_semantics<parallel>], iteration_bounds = array<i64: 1>, scalar_prefetch = 0 : i64, scratch_operands = 0 : i64, tpu.core_type = #tpu.core_type<tc>, window_params = [{transform_indices = @transform_0, window_bounds = array<i64: 2, 8, 32>}, {pipeline_mode = #tpu.pipeline_mode<synchronous>, transform_indices = @transform_1, window_bounds = array<i64: 32, 16>}, {pipeline_mode = #tpu.pipeline_mode<synchronous>, transform_indices = @transform_2, window_bounds = array<i64: 1, 16>}, {pipeline_mode = #tpu.pipeline_mode<synchronous>, transform_indices = @transform_3, window_bounds = array<i64: 1, 16>}, {transform_indices = @transform_4, window_bounds = array<i64: 2, 1, 8>}]} {
    %c0 = arith.constant 0 : index
    %c0_0 = arith.constant 0 : index
    %c0_1 = arith.constant 0 : index
    %0 = vector.load %arg1[%c0, %c0_0, %c0_1] : memref<2x8x32xf32, #tpu.memory_space<vmem>>, vector<2x8x32xf32>
    %1 = vector.shape_cast %0 : vector<2x8x32xf32> to vector<16x32xf32>
    %c0_2 = arith.constant 0 : index
    %c0_3 = arith.constant 0 : index
    %2 = vector.load %arg2[%c0_2, %c0_3] : memref<32x16xf32, #tpu.memory_space<vmem>>, vector<32x16xf32>
    %cst = arith.constant dense<0.000000e+00> : vector<16x16xf32>
    %3 = tpu.matmul %1, %2, %cst {dimension_numbers = #tpu.dot_dimension_numbers<[1], [0], [0], [1], [0, 0, 1, 1], [], []>} : vector<16x32xf32>, vector<32x16xf32>, vector<16x16xf32> -> vector<16x16xf32>
    %c0_4 = arith.constant 0 : index
    %c0_5 = arith.constant 0 : index
    %4 = vector.load %arg3[%c0_4, %c0_5] : memref<1x16xf32, #tpu.memory_space<vmem>>, vector<1x16xf32>
    %5 = vector.broadcast %4 : vector<1x16xf32> to vector<16x16xf32>
    %6 = arith.addf %3, %5 : vector<16x16xf32>
    %7 = math.tanh %6 : vector<16x16xf32>
    %8 = vector.shape_cast %7 : vector<16x16xf32> to vector<2x8x16xf32>
    %c0_6 = arith.constant 0 : index
    %c0_7 = arith.constant 0 : index
    %9 = vector.load %arg4[%c0_6, %c0_7] : memref<1x16xf32, #tpu.memory_space<vmem>>, vector<1x16xf32>
    %10 = vector.shape_cast %9 : vector<1x16xf32> to vector<1x1x16xf32>
    %11 = vector.broadcast %10 : vector<1x1x16xf32> to vector<2x8x16xf32>
    %12 = arith.mulf %8, %11 : vector<2x8x16xf32>
    %cst_8 = arith.constant dense<0.000000e+00> : vector<2x8xf32>
    %13 = vector.multi_reduction <add>, %12, %cst_8 [2] : vector<2x8x16xf32> to vector<2x8xf32>
    %cst_9 = arith.constant dense<0xFF800000> : vector<2xf32>
    %14 = vector.multi_reduction <maximumf>, %13, %cst_9 [1] : vector<2x8xf32> to vector<2xf32>
    %15 = vector.shape_cast %14 : vector<2xf32> to vector<2x1xf32>
    %16 = vector.broadcast %15 : vector<2x1xf32> to vector<2x8xf32>
    %17 = arith.subf %13, %16 : vector<2x8xf32>
    %18 = math.exp %17 : vector<2x8xf32>
    %cst_10 = arith.constant dense<0.000000e+00> : vector<2xf32>
    %19 = vector.multi_reduction <add>, %18, %cst_10 [1] : vector<2x8xf32> to vector<2xf32>
    %20 = vector.shape_cast %19 : vector<2xf32> to vector<2x1xf32>
    %21 = tpu.reciprocal %20 {approx = true} : vector<2x1xf32> -> vector<2x1xf32>
    %22 = vector.broadcast %21 : vector<2x1xf32> to vector<2x8xf32>
    %23 = arith.mulf %18, %22 : vector<2x8xf32>
    %24 = vector.shape_cast %23 : vector<2x8xf32> to vector<2x1x8xf32>
    %c0_11 = arith.constant 0 : index
    %c0_12 = arith.constant 0 : index
    %c0_13 = arith.constant 0 : index
    %25 = vector.load %arg5[%c0_11, %c0_12, %c0_13] : memref<2x1x8xf32, #tpu.memory_space<vmem>>, vector<2x1x8xf32>
    tpu.vector_store %arg5[%c0_11, %c0_12, %c0_13], %24 {strides = array<i32>} : memref<2x1x8xf32, #tpu.memory_space<vmem>>, vector<2x1x8xf32>,
    return
  }
  func.func @transform_0(%arg0: i32) -> (i32, i32, i32) {
    %c0_i32 = arith.constant 0 : i32
    %c0_i32_0 = arith.constant 0 : i32
    %c0_i32_1 = arith.constant 0 : i32
    return %arg0, %c0_i32, %c0_i32_0 : i32, i32, i32
  }
  func.func @transform_1(%arg0: i32) -> (i32, i32) {
    %c0_i32 = arith.constant 0 : i32
    %c0_i32_0 = arith.constant 0 : i32
    %c0_i32_1 = arith.constant 0 : i32
    return %c0_i32, %c0_i32_0 : i32, i32
  }
  func.func @transform_2(%arg0: i32) -> (i32, i32) {
    %c0_i32 = arith.constant 0 : i32
    %c0_i32_0 = arith.constant 0 : i32
    %c0_i32_1 = arith.constant 0 : i32
    return %c0_i32, %c0_i32_0 : i32, i32
  }
  func.func @transform_3(%arg0: i32) -> (i32, i32) {
    %c0_i32 = arith.constant 0 : i32
    %c0_i32_0 = arith.constant 0 : i32
    %c0_i32_1 = arith.constant 0 : i32
    return %c0_i32, %c0_i32_0 : i32, i32
  }
  func.func @transform_4(%arg0: i32) -> (i32, i32, i32) {
    %c0_i32 = arith.constant 0 : i32
    %c0_i32_0 = arith.constant 0 : i32
    %c0_i32_1 = arith.constant 0 : i32
    return %arg0, %c0_i32, %c0_i32_0 : i32, i32, i32
  }
}

</mosaic_0001>

<llo_original>
// kernel: tpu_custom_call.1
$region0: #{tpu_custom_call.1}
  #allocation0 [shape = 'u32[]', space=smem, size = 0x4, offset = 0x4, fixed_abs, tag = 'smem constant byte address 0x4 - core index']
  #allocation1 [shape = 'u32[144,128]{1,0:T(1,128)}', space=vmem, size = 0x12000, scoped, tag = 'internal scratch']
  %s0 = inlined_call_operand.vmem [shape: f32[2,8,32], index: 0, kind: input, shape index: {}]
  %s1 = inlined_call_operand.vmem [shape: f32[32,16], index: 1, kind: input, shape index: {}]
  %s2 = inlined_call_operand.vmem [shape: f32[1,16], index: 2, kind: input, shape index: {}]
  %s3 = inlined_call_operand.vmem [shape: f32[1,16], index: 3, kind: input, shape index: {}]
  %s4 = inlined_call_operand.hbm [shape: f32[2,1,8], index: 4, kind: output, shape index: {}]
  %s5 = sld [smem:[#allocation0]]
  $region26: #{tpu_custom_call.1} parent=0
    _
  %s7 = ssub.s32 1, %s5
  %s8 = scalar_select 0, %s7, %s5
  $region1: #{tpu_custom_call.1} parent=0
    #allocation2 [shape = 'u8[1024]{0}', space=vmem, size = 0x400, scoped, tag = 'output window, operand 0, single buffered']
    #allocation3 [shape = 's32[1]{0}', space=sflag, size = 0x4, scoped, tag = 'scoped memory for tpu_custom_call.1']
    %9 = vsyncpa [#allocation3], 0
    // Predicated region
    $region2: #{tpu_custom_call.1} parent=1 // pred_check
      _
    $region3: #{tpu_custom_call.1} parent=1 // pred_check_branch
      %11 = sbr.rel (0) target = $region5
    $region4: #{tpu_custom_call.1} parent=1 // pred_region
      _
    $region5: #{tpu_custom_call.1} parent=1 // pred_fallthru
      _
    // Predicated region
    $region6: #{tpu_custom_call.1} parent=1 // pred_check
      _
    $region7: #{tpu_custom_call.1} parent=1 // pred_check_branch
      %13 = sbr.rel (0) target = $region9
    $region8: #{tpu_custom_call.1} parent=1 // pred_region
      _
    $region9: #{tpu_custom_call.1} parent=1 // pred_fallthru
      _
    // Predicated region
    $region10: #{tpu_custom_call.1} parent=1 // pred_check
      _
    $region11: #{tpu_custom_call.1} parent=1 // pred_check_branch
      %15 = sbr.rel (0) target = $region13
    $region12: #{tpu_custom_call.1} parent=1 // pred_region
      _
    $region13: #{tpu_custom_call.1} parent=1 // pred_fallthru
      _
    // Predicated region
    $region14: #{tpu_custom_call.1} parent=1 // pred_check
      _
    $region15: #{tpu_custom_call.1} parent=1 // pred_check_branch
      %17 = sbr.rel (0) target = $region17
    $region16: #{tpu_custom_call.1} parent=1 // pred_region
      _
    $region17: #{tpu_custom_call.1} parent=1 // pred_fallthru
      _
    %v18 = vld [vmem:[%s0] sm:$0xff]
    %v19 = vld [vmem:[%s0 + $0x8] sm:$0xff]
    %v20 = vld [vmem:[%s1] sm:$0xff]
    %v21 = vld [vmem:[%s1 + $0x8] sm:$0xff]
    %v22 = vld [vmem:[%s1 + $0x10] sm:$0xff]
    %v23 = vld [vmem:[%s1 + $0x18] sm:$0xff]
    %v24 = vld [vmem:[%s2] sm:$0x1]
    %v26 = vlaneseq
    %v27 = vshrl.u32 %v26, 7
    %v28 = vsub.s32 0, %v27
    %v29 = vrot.slane %v24, %v28
    %vm31 = vcmask 261120
    %v33 = vsel %vm31, %v18, 0
    %v36 = vsel %vm31, %v19, 0
    %38 = vmatprep.subr.mxu0 0.0
    %39 = vmatpush1.msra.mxu0 %v20
    %40 = vmatprep.subr.mxu0 0.0
    %41 = vmatpush1.msra.mxu0 %v21
    %42 = vmatprep.subr.mxu0 0.0
    %43 = vmatpush1.msra.mxu0 %v22
    %44 = vmatprep.subr.mxu0 0.0
    %45 = vmatpush1.msra.mxu0 %v23
    %46 = vmatprep.subr.mxu0 0.0
    %47 = vmatpush1.msra.mxu0 0.0
    %48 = vmatprep.subr.mxu0 0.0
    %49 = vmatpush1.msra.mxu0 0.0
    %50 = vmatprep.subr.mxu0 0.0
    %51 = vmatpush1.msra.mxu0 0.0
    %52 = vmatprep.subr.mxu0 0.0
    %53 = vmatpush1.msra.mxu0 0.0
    %54 = vmatprep.subr.mxu0 0.0
    %55 = vmatpush1.msra.mxu0 0.0
    %56 = vmatprep.subr.mxu0 0.0
    %57 = vmatpush1.msra.mxu0 0.0
    %58 = vmatprep.subr.mxu0 0.0
    %59 = vmatpush1.msra.mxu0 0.0
    %60 = vmatprep.subr.mxu0 0.0
    %61 = vmatpush1.msra.mxu0 0.0
    %62 = vmatprep.subr.mxu0 0.0
    %63 = vmatpush1.msra.mxu0 0.0
    %64 = vmatprep.subr.mxu0 0.0
    %65 = vmatpush1.msra.mxu0 0.0
    %66 = vmatprep.subr.mxu0 0.0
    %67 = vmatpush1.msra.mxu0 0.0
    %68 = vmatprep.subr.mxu0 0.0
    %69 = vmatpush1.msra.mxu0 0.0
    %70 = vmatprep.subr.mxu0 0.0
    %71 = vmatpush1.msra.mxu0 0.0
    %72 = vmatprep.subr.mxu0 0.0
    %73 = vmatpush1.msra.mxu0 0.0
    %74 = vmatprep.subr.mxu0 0.0
    %75 = vmatpush1.msra.mxu0 0.0
    %76 = vmatprep.subr.mxu0 0.0
    %77 = vmatpush1.msra.mxu0 0.0
    %78 = vmatprep.subr.mxu0 0.0
    %79 = vmatpush1.msra.mxu0 0.0
    %80 = vmatprep.subr.mxu0 0.0
    %81 = vmatpush1.msra.mxu0 0.0
    %82 = vmatprep.subr.mxu0 0.0
    %83 = vmatpush1.msra.mxu0 0.0
    %84 = vmatprep.subr.mxu0 0.0
    %85 = vmatpush1.msra.mxu0 0.0
    %86 = vmatprep.subr.mxu0 0.0
    %87 = vmatpush1.msra.mxu0 0.0
    %88 = vmatprep.subr.mxu0 0.0
    %89 = vmatpush1.msra.mxu0 0.0
    %90 = vmatprep.subr.mxu0 0.0
    %91 = vmatpush1.msra.mxu0 0.0
    %92 = vmatprep.subr.mxu0 0.0
    %93 = vmatpush1.msra.mxu0 0.0
    %94 = vmatprep.subr.mxu0 0.0
    %95 = vmatpush1.msra.mxu0 0.0
    %96 = vmatprep.subr.mxu0 0.0
    %97 = vmatpush1.msra.mxu0 0.0
    %98 = vmatprep.subr.mxu0 0.0
    %99 = vmatpush1.msra.mxu0 0.0
    %100 = vmatprep.subr.mxu0 0.0
    %101 = vmatpush1.msra.mxu0 0.0
    %102 = vmatprep.mubr.f32.mxu0 0.0
    %103 = vmatmul.mubr.f32.gmra.mrb[0].mxu0 %v33
    %v104 = vpop.f32.mrb[0].mxu0
    %v105 = vadd.f32 %v29, %v104
    %v106 = vpop.f32.mrb[0].mxu0
    %107 = vmatprep.mubr.f32.mxu0 0.0
    %108 = vmatmul.mubr.f32.gmra.mrb[0].mxu0 %v36
    %v109 = vpop.f32.mrb[0].mxu0
    %v110 = vadd.f32 %v29, %v109
    %v111 = vpop.f32.mrb[0].mxu0
    %112 = vdwg.mxu0
    %v113 = vtanh.pop %v105
    %v114 = vtanh.pop %v110
    %v115 = vld [vmem:[%s3] sm:$0x1]
    %v117 = vlaneseq
    %v118 = vshrl.u32 %v117, 7
    %v119 = vsub.s32 0, %v118
    %v120 = vrot.slane %v115, %v119
    %v122 = vmul.f32 %v113, %v120
    %v123 = vmul.f32 %v114, %v120
    %vm124 = vcmask 130048
    %v125 = vsel %vm124, %v122, 0.0
    %126 = vadd.xlane.f32.xlu0 %v125
    %v127 = vpop.xlane.xlu0 %126
    %v128 = vsel %vm124, %v123, 0.0
    %129 = vadd.xlane.f32.xlu0 %v128
    %v130 = vpop.xlane.xlu0 %129
    %v133 = vlaneseq
    %v134 = vand.u32 %v133, 127
    %v135 = vlaneseq
    %v136 = vshrl.u32 %v135, 7
    %v137 = vsub.s32 %v134, %v136
    %v138 = vrot.slane %v127, %v137
    %v139 = vlaneseq
    %v140 = vshrl.u32 %v139, 7
    %v141 = vsub.s32 %v134, %v140
    %v142 = vrot.slane %v130, %v141
    %vm143 = vcmask 1041409
    %v144 = vsel %vm143, %v142, %v138
    %vm146 = vcmask 58368
    %v147 = vsel %vm146, %v144, -inf
    %148 = vmax.xlane.f32.xlu0 %v147
    %v149 = vpop.xlane.xlu0 %148
    %v151 = vlaneseq
    %v152 = vshrl.u32 %v151, 7
    %v153 = vsub.s32 0, %v152
    %v154 = vrot.slane %v149, %v153
    %v155 = vlaneseq
    %v156 = vshrl.u32 %v155, 7
    %v157 = vsub.s32 1, %v156
    %v158 = vrot.slane %v149, %v157
    %v161 = vsub.f32 %v127, %v154
    %v162 = vsub.f32 %v130, %v158
    %v163 = vmul.f32 %v161, 1.442695
    %v164 = vpow.pop %v163
    %v165 = vmul.f32 %v162, 1.442695
    %v166 = vpow.pop %v165
    %169 = vset.pattern.permute.xlu0 0
    %170 = vperm.xlu0 %169, %v164
    %v171 = vpop.permute.xlu0 %170
    %172 = vset.pattern.permute.xlu0 0
    %173 = vperm.xlu0 %172, %v166
    %v174 = vpop.permute.xlu0 %173
    %v175 = vlaneseq
    %v176 = vshrl.u32 %v175, 7
    %v177 = vsub.s32 %v134, %v176
    %v178 = vrot.slane %v171, %v177
    %v179 = vlaneseq
    %v180 = vshrl.u32 %v179, 7
    %v181 = vsub.s32 %v134, %v180
    %v182 = vrot.slane %v174, %v181
    %v183 = vsel %vm143, %v182, %v178
    %v185 = vsel %vm146, %v183, 0.0
    %186 = vadd.xlane.f32.xlu0 %v185
    %v187 = vpop.xlane.xlu0 %186
    %v188 = vrcp.pop %v187
    %v190 = vlaneseq
    %v191 = vshrl.u32 %v190, 7
    %v192 = vsub.s32 0, %v191
    %v193 = vrot.slane %v188, %v192
    %v194 = vlaneseq
    %v195 = vshrl.u32 %v194, 7
    %v196 = vsub.s32 1, %v195
    %v197 = vrot.slane %v188, %v196
    %v200 = vmul.f32 %v164, %v193
    %v201 = vmul.f32 %v166, %v197
    %204 = vset.pattern.permute.xlu0 0
    %205 = vperm.xlu0 %204, %v200
    %v206 = vpop.permute.xlu0 %205
    %207 = vset.pattern.permute.xlu0 0
    %208 = vperm.xlu0 %207, %v201
    %v209 = vpop.permute.xlu0 %208
    %v210 = vlaneseq
    %v211 = vshrl.u32 %v210, 7
    %v212 = vsub.s32 %v134, %v211
    %v213 = vrot.slane %v206, %v212
    %v214 = vlaneseq
    %v215 = vshrl.u32 %v214, 7
    %v216 = vsub.s32 %v134, %v215
    %v217 = vrot.slane %v209, %v216
    %vm220 = vcmask 57344
    %221 = vst.msk [vmem:[#allocation2] sm:$0x1] %vm220, %v213
    %222 = vst.msk [vmem:[#allocation2 + $0x1] sm:$0x1] %vm220, %v217
    // Predicated region
    $region18: #{tpu_custom_call.1} parent=1 // pred_check
      _
    $region19: #{tpu_custom_call.1} parent=1 // pred_check_branch
      %224 = sbr.rel (0) target = $region21
    $region20: #{tpu_custom_call.1} parent=1 // pred_region
      %s226 = ssub.s32 32, 32
      %227 = vsyncadd [#allocation3], %s226
      %s228 = sshll.u32 [#allocation2], 4
      %s229 = int_to_ptr.vmem [resolvable:$true] %s228
      %234 = dma.vmem_to_hbm [thread:$0]  %s229, 32, %s4, [#allocation3], 16, 16, 1
    $region21: #{tpu_custom_call.1} parent=1 // pred_fallthru
      _
    // Predicated region
    $region22: #{tpu_custom_call.1} parent=1 // pred_check
      _
    $region23: #{tpu_custom_call.1} parent=1 // pred_check_branch
      %236 = sbr.rel (0) target = $region25
    $region24: #{tpu_custom_call.1} parent=1 // pred_region
      %237 = dma.done [#allocation3], 32
    $region25: #{tpu_custom_call.1} parent=1 // pred_fallthru
      _
    %238 = vsyncpa [#allocation3], 1

// kernel: tpu_custom_call.1
$region0: #{tpu_custom_call.1}
  #allocation0 [shape = 'u32[]', space=smem, size = 0x4, offset = 0x4, fixed_abs, tag = 'smem constant byte address 0x4 - core index']
  #allocation1 [shape = 'u32[144,128]{1,0:T(1,128)}', space=vmem, size = 0x12000, scoped, tag = 'internal scratch']
  %s0 = inlined_call_operand.vmem [shape: f32[2,8,32], index: 0, kind: input, shape index: {}]
  %s1 = inlined_call_operand.vmem [shape: f32[32,16], index: 1, kind: input, shape index: {}]
  %s2 = inlined_call_operand.vmem [shape: f32[1,16], index: 2, kind: input, shape index: {}]
  %s3 = inlined_call_operand.vmem [shape: f32[1,16], index: 3, kind: input, shape index: {}]
  %s4 = inlined_call_operand.hbm [shape: f32[2,1,8], index: 4, kind: output, shape index: {}]
  %s5 = sld [smem:[#allocation0]]
  $region26: #{tpu_custom_call.1} parent=0
    _
  %s7 = ssub.s32 1, %s5
  %s8 = scalar_select 0, %s7, %s5
  $region1: #{tpu_custom_call.1} parent=0
    #allocation2 [shape = 'u8[1024]{0}', space=vmem, size = 0x400, scoped, tag = 'output window, operand 0, single buffered']
    #allocation3 [shape = 's32[1]{0}', space=sflag, size = 0x4, scoped, tag = 'scoped memory for tpu_custom_call.1']
    %9 = vsyncpa [#allocation3], 0
    // Predicated region
    $region2: #{tpu_custom_call.1} parent=1 // pred_check
      _
    $region3: #{tpu_custom_call.1} parent=1 // pred_check_branch
      %11 = sbr.rel (0) target = $region5
    $region4: #{tpu_custom_call.1} parent=1 // pred_region
      _
    $region5: #{tpu_custom_call.1} parent=1 // pred_fallthru
      _
    // Predicated region
    $region6: #{tpu_custom_call.1} parent=1 // pred_check
      _
    $region7: #{tpu_custom_call.1} parent=1 // pred_check_branch
      %13 = sbr.rel (0) target = $region9
    $region8: #{tpu_custom_call.1} parent=1 // pred_region
      _
    $region9: #{tpu_custom_call.1} parent=1 // pred_fallthru
      _
    // Predicated region
    $region10: #{tpu_custom_call.1} parent=1 // pred_check
      _
    $region11: #{tpu_custom_call.1} parent=1 // pred_check_branch
      %15 = sbr.rel (0) target = $region13
    $region12: #{tpu_custom_call.1} parent=1 // pred_region
      _
    $region13: #{tpu_custom_call.1} parent=1 // pred_fallthru
      _
    // Predicated region
    $region14: #{tpu_custom_call.1} parent=1 // pred_check
      _
    $region15: #{tpu_custom_call.1} parent=1 // pred_check_branch
      %17 = sbr.rel (0) target = $region17
    $region16: #{tpu_custom_call.1} parent=1 // pred_region
      _
    $region17: #{tpu_custom_call.1} parent=1 // pred_fallthru
      _
    %v18 = vld [vmem:[%s0] sm:$0xff]
    %v19 = vld [vmem:[%s0 + $0x8] sm:$0xff]
    %v20 = vld [vmem:[%s1] sm:$0xff]
    %v21 = vld [vmem:[%s1 + $0x8] sm:$0xff]
    %v22 = vld [vmem:[%s1 + $0x10] sm:$0xff]
    %v23 = vld [vmem:[%s1 + $0x18] sm:$0xff]
    %v24 = vld [vmem:[%s2] sm:$0x1]
    %v26 = vlaneseq
    %v27 = vshrl.u32 %v26, 7
    %v28 = vsub.s32 0, %v27
    %v29 = vrot.slane %v24, %v28
    %vm31 = vcmask 261120
    %v33 = vsel %vm31, %v18, 0
    %v36 = vsel %vm31, %v19, 0
    %38 = vmatprep.subr.mxu0 0.0
    %39 = vmatpush1.msra.mxu0 %v20
    %40 = vmatprep.subr.mxu0 0.0
    %41 = vmatpush1.msra.mxu0 %v21
    %42 = vmatprep.subr.mxu0 0.0
    %43 = vmatpush1.msra.mxu0 %v22
    %44 = vmatprep.subr.mxu0 0.0
    %45 = vmatpush1.msra.mxu0 %v23
    %46 = vmatprep.subr.mxu0 0.0
    %47 = vmatpush1.msra.mxu0 0.0
    %48 = vmatprep.subr.mxu0 0.0
    %49 = vmatpush1.msra.mxu0 0.0
    %50 = vmatprep.subr.mxu0 0.0
    %51 = vmatpush1.msra.mxu0 0.0
    %52 = vmatprep.subr.mxu0 0.0
    %53 = vmatpush1.msra.mxu0 0.0
    %54 = vmatprep.subr.mxu0 0.0
    %55 = vmatpush1.msra.mxu0 0.0
    %56 = vmatprep.subr.mxu0 0.0
    %57 = vmatpush1.msra.mxu0 0.0
    %58 = vmatprep.subr.mxu0 0.0
    %59 = vmatpush1.msra.mxu0 0.0
    %60 = vmatprep.subr.mxu0 0.0
    %61 = vmatpush1.msra.mxu0 0.0
    %62 = vmatprep.subr.mxu0 0.0
    %63 = vmatpush1.msra.mxu0 0.0
    %64 = vmatprep.subr.mxu0 0.0
    %65 = vmatpush1.msra.mxu0 0.0
    %66 = vmatprep.subr.mxu0 0.0
    %67 = vmatpush1.msra.mxu0 0.0
    %68 = vmatprep.subr.mxu0 0.0
    %69 = vmatpush1.msra.mxu0 0.0
    %70 = vmatprep.subr.mxu0 0.0
    %71 = vmatpush1.msra.mxu0 0.0
    %72 = vmatprep.subr.mxu0 0.0
    %73 = vmatpush1.msra.mxu0 0.0
    %74 = vmatprep.subr.mxu0 0.0
    %75 = vmatpush1.msra.mxu0 0.0
    %76 = vmatprep.subr.mxu0 0.0
    %77 = vmatpush1.msra.mxu0 0.0
    %78 = vmatprep.subr.mxu0 0.0
    %79 = vmatpush1.msra.mxu0 0.0
    %80 = vmatprep.subr.mxu0 0.0
    %81 = vmatpush1.msra.mxu0 0.0
    %82 = vmatprep.subr.mxu0 0.0
    %83 = vmatpush1.msra.mxu0 0.0
    %84 = vmatprep.subr.mxu0 0.0
    %85 = vmatpush1.msra.mxu0 0.0
    %86 = vmatprep.subr.mxu0 0.0
    %87 = vmatpush1.msra.mxu0 0.0
    %88 = vmatprep.subr.mxu0 0.0
    %89 = vmatpush1.msra.mxu0 0.0
    %90 = vmatprep.subr.mxu0 0.0
    %91 = vmatpush1.msra.mxu0 0.0
    %92 = vmatprep.subr.mxu0 0.0
    %93 = vmatpush1.msra.mxu0 0.0
    %94 = vmatprep.subr.mxu0 0.0
    %95 = vmatpush1.msra.mxu0 0.0
    %96 = vmatprep.subr.mxu0 0.0
    %97 = vmatpush1.msra.mxu0 0.0
    %98 = vmatprep.subr.mxu0 0.0
    %99 = vmatpush1.msra.mxu0 0.0
    %100 = vmatprep.subr.mxu0 0.0
    %101 = vmatpush1.msra.mxu0 0.0
    %102 = vmatprep.mubr.f32.mxu0 0.0
    %103 = vmatmul.mubr.f32.gmra.mrb[0].mxu0 %v33
    %v104 = vpop.f32.mrb[0].mxu0
    %v105 = vadd.f32 %v29, %v104
    %v106 = vpop.f32.mrb[0].mxu0
    %107 = vmatprep.mubr.f32.mxu0 0.0
    %108 = vmatmul.mubr.f32.gmra.mrb[0].mxu0 %v36
    %v109 = vpop.f32.mrb[0].mxu0
    %v110 = vadd.f32 %v29, %v109
    %v111 = vpop.f32.mrb[0].mxu0
    %112 = vdwg.mxu0
    %v113 = vtanh.pop %v105
    %v114 = vtanh.pop %v110
    %v115 = vld [vmem:[%s3] sm:$0x1]
    %v117 = vlaneseq
    %v118 = vshrl.u32 %v117, 7
    %v119 = vsub.s32 0, %v118
    %v120 = vrot.slane %v115, %v119
    %v122 = vmul.f32 %v113, %v120
    %v123 = vmul.f32 %v114, %v120
    %vm124 = vcmask 130048
    %v125 = vsel %vm124, %v122, 0.0
    %126 = vadd.xlane.f32.xlu0 %v125
    %v127 = vpop.xlane.xlu0 %126
    %v128 = vsel %vm124, %v123, 0.0
    %129 = vadd.xlane.f32.xlu0 %v128
    %v130 = vpop.xlane.xlu0 %129
    %v133 = vlaneseq
    %v134 = vand.u32 %v133, 127
    %v135 = vlaneseq
    %v136 = vshrl.u32 %v135, 7
    %v137 = vsub.s32 %v134, %v136
    %v138 = vrot.slane %v127, %v137
    %v139 = vlaneseq
    %v140 = vshrl.u32 %v139, 7
    %v141 = vsub.s32 %v134, %v140
    %v142 = vrot.slane %v130, %v141
    %vm143 = vcmask 1041409
    %v144 = vsel %vm143, %v142, %v138
    %vm146 = vcmask 58368
    %v147 = vsel %vm146, %v144, -inf
    %148 = vmax.xlane.f32.xlu0 %v147
    %v149 = vpop.xlane.xlu0 %148
    %v151 = vlaneseq
    %v152 = vshrl.u32 %v151, 7
    %v153 = vsub.s32 0, %v152
    %v154 = vrot.slane %v149, %v153
    %v155 = vlaneseq
    %v156 = vshrl.u32 %v155, 7
    %v157 = vsub.s32 1, %v156
    %v158 = vrot.slane %v149, %v157
    %v161 = vsub.f32 %v127, %v154
    %v162 = vsub.f32 %v130, %v158
    %v163 = vmul.f32 %v161, 1.442695
    %v164 = vpow.pop %v163
    %v165 = vmul.f32 %v162, 1.442695
    %v166 = vpow.pop %v165
    %169 = vset.pattern.permute.xlu0 0
    %170 = vperm.xlu0 %169, %v164
    %v171 = vpop.permute.xlu0 %170
    %172 = vset.pattern.permute.xlu0 0
    %173 = vperm.xlu0 %172, %v166
    %v174 = vpop.permute.xlu0 %173
    %v175 = vlaneseq
    %v176 = vshrl.u32 %v175, 7
    %v177 = vsub.s32 %v134, %v176
    %v178 = vrot.slane %v171, %v177
    %v179 = vlaneseq
    %v180 = vshrl.u32 %v179, 7
    %v181 = vsub.s32 %v134, %v180
    %v182 = vrot.slane %v174, %v181
    %v183 = vsel %vm143, %v182, %v178
    %v185 = vsel %vm146, %v183, 0.0
    %186 = vadd.xlane.f32.xlu0 %v185
    %v187 = vpop.xlane.xlu0 %186
    %v188 = vrcp.pop %v187
    %v190 = vlaneseq
    %v191 = vshrl.u32 %v190, 7
    %v192 = vsub.s32 0, %v191
    %v193 = vrot.slane %v188, %v192
    %v194 = vlaneseq
    %v195 = vshrl.u32 %v194, 7
    %v196 = vsub.s32 1, %v195
    %v197 = vrot.slane %v188, %v196
    %v200 = vmul.f32 %v164, %v193
    %v201 = vmul.f32 %v166, %v197
    %204 = vset.pattern.permute.xlu0 0
    %205 = vperm.xlu0 %204, %v200
    %v206 = vpop.permute.xlu0 %205
    %207 = vset.pattern.permute.xlu0 0
    %208 = vperm.xlu0 %207, %v201
    %v209 = vpop.permute.xlu0 %208
    %v210 = vlaneseq
    %v211 = vshrl.u32 %v210, 7
    %v212 = vsub.s32 %v134, %v211
    %v213 = vrot.slane %v206, %v212
    %v214 = vlaneseq
    %v215 = vshrl.u32 %v214, 7
    %v216 = vsub.s32 %v134, %v215
    %v217 = vrot.slane %v209, %v216
    %vm220 = vcmask 57344
    %221 = vst.msk [vmem:[#allocation2] sm:$0x1] %vm220, %v213
    %222 = vst.msk [vmem:[#allocation2 + $0x1] sm:$0x1] %vm220, %v217
    // Predicated region
    $region18: #{tpu_custom_call.1} parent=1 // pred_check
      _
    $region19: #{tpu_custom_call.1} parent=1 // pred_check_branch
      %224 = sbr.rel (0) target = $region21
    $region20: #{tpu_custom_call.1} parent=1 // pred_region
      %s226 = ssub.s32 32, 32
      %227 = vsyncadd [#allocation3], %s226
      %s228 = sshll.u32 [#allocation2], 4
      %s229 = int_to_ptr.vmem [resolvable:$true] %s228
      %234 = dma.vmem_to_hbm [thread:$0]  %s229, 32, %s4, [#allocation3], 16, 16, 1
    $region21: #{tpu_custom_call.1} parent=1 // pred_fallthru
      _
    // Predicated region
    $region22: #{tpu_custom_call.1} parent=1 // pred_check
      _
    $region23: #{tpu_custom_call.1} parent=1 // pred_check_branch
      %236 = sbr.rel (0) target = $region25
    $region24: #{tpu_custom_call.1} parent=1 // pred_region
      %237 = dma.done [#allocation3], 32
    $region25: #{tpu_custom_call.1} parent=1 // pred_fallthru
      _
    %238 = vsyncpa [#allocation3], 1

</llo_original>
